<compile_context>
chip_gen: v6e
topology: v6e:2x2x1
jax: 0.10.0
libtpu: 0.0.40
codegen_flags: <defaults>
</compile_context>

<pallas_src>
import jax
import jax.numpy as jnp
from jax.experimental import pallas as pl
from jax.experimental.pallas import tpu as pltpu


def _ecd_fused_kernel(
    xa_ref, xb_ref,            # inputs:  [TB, D_a], [TB, D_b]
    wa_ref, ba_ref,            # enc a:   [D_a, H],  [1, H]
    wb_ref, bb_ref,            # enc b:   [D_b, H],  [1, H]
    wca_ref, wcb_ref, bc_ref,  # combiner (row-split): [H, F], [H, F], [1, F]
    wd1_ref, bd1_ref,          # dec 1:   [F, O1],   [1, O1]
    wd2_ref, bd2_ref,          # dec 2:   [F, O2],   [1, O2]
    o1_ref, o2_ref,            # outputs: [TB, O1],  [TB, O2]
):
    f32 = jnp.float32

    # encoders (Linear + ReLU), weights already [Din, Dout] -> no transpose
    enc_a = jnp.maximum(
        jnp.dot(xa_ref[...], wa_ref[...], preferred_element_type=f32) + ba_ref[...], 0.0)
    enc_b = jnp.maximum(
        jnp.dot(xb_ref[...], wb_ref[...], preferred_element_type=f32) + bb_ref[...], 0.0)

    # combiner on the implicit concat:
    #   concat([enc_a, enc_b], 1) @ Wc  ==  enc_a @ Wc[:H] + enc_b @ Wc[H:]
    feats = (jnp.dot(enc_a, wca_ref[...], preferred_element_type=f32)
             + jnp.dot(enc_b, wcb_ref[...], preferred_element_type=f32)
             + bc_ref[...])
    feats = jnp.maximum(feats, 0.0)

    # decoders (plain Linear) -- `feats` is still register/VMEM resident
    o1_ref[...] = (jnp.dot(feats, wd1_ref[...], preferred_element_type=f32)
                   + bd1_ref[...]).astype(o1_ref.dtype)
    o2_ref[...] = (jnp.dot(feats, wd2_ref[...], preferred_element_type=f32)
                   + bd2_ref[...]).astype(o2_ref.dtype)


def ecd_forward(xa, xb, p, *, batch_tile=512):
    """Fused ECD forward: dict of two outputs from a single pallas_call.

    xa: [B, D_a], xb: [B, D_b]; parameter dict `p` holds pre-transposed weights
    ([Din, Dout]) and 2-D biases ([1, Dout]).
    """
    B, D_a = xa.shape
    _, D_b = xb.shape
    H = p["wa"].shape[1]
    F = p["wca"].shape[1]
    O1 = p["wd1"].shape[1]
    O2 = p["wd2"].shape[1]

    # Batch tiling: single block for small B, tiled (weights VMEM-resident across
    # steps) for large B. TB is conservative enough for v7x's 64 MiB VMEM.
    TB = B if B <= batch_tile else batch_tile
    assert B % TB == 0, "batch must be a multiple of the batch tile"
    grid = (B // TB,)

    def batch_spec(d):
        # tiles the batch dim; feature dim is the full array dim (lane axis)
        return pl.BlockSpec((TB, d), lambda i: (i, 0))

    def resident_spec(shape):
        # same block every grid step -> stays in VMEM across the batch loop
        return pl.BlockSpec(shape, lambda i: (0, 0))

    out_shapes = (
        jax.ShapeDtypeStruct((B, O1), xa.dtype),
        jax.ShapeDtypeStruct((B, O2), xa.dtype),
    )

    o1, o2 = pl.pallas_call(
        _ecd_fused_kernel,
        out_shape=out_shapes,
        grid=grid,
        in_specs=[
            batch_spec(D_a), batch_spec(D_b),
            resident_spec(p["wa"].shape), resident_spec(p["ba"].shape),
            resident_spec(p["wb"].shape), resident_spec(p["bb"].shape),
            resident_spec(p["wca"].shape), resident_spec(p["wcb"].shape),
            resident_spec(p["bc"].shape),
            resident_spec(p["wd1"].shape), resident_spec(p["bd1"].shape),
            resident_spec(p["wd2"].shape), resident_spec(p["bd2"].shape),
        ],
        out_specs=(batch_spec(O1), batch_spec(O2)),
        compiler_params=pltpu.CompilerParams(
            dimension_semantics=("parallel",)),  # megacore batch split on v7x
    )(
        xa, xb,
        p["wa"], p["ba"], p["wb"], p["bb"],
        p["wca"], p["wcb"], p["bc"],
        p["wd1"], p["bd1"], p["wd2"], p["bd2"],
    )
    return {"out1": o1, "out2": o2}


class ECDPallas:
    """JAX/Pallas equivalent of the PyTorch ECD module with concrete sub-modules."""

    def __init__(self, key, d_a=16, d_b=32, hidden=32, feat=64, o1=16, o2=8,
                 dtype=jnp.float32):
        ks = jax.random.split(key, 10)

        def init_linear(kw, kb, dout, din):
            # PyTorch-style init, then pre-transpose once to [din, dout] so the
            # kernel computes x @ W with no in-kernel transpose.
            bound = 1.0 / jnp.sqrt(jnp.float32(din))
            w = jax.random.uniform(kw, (dout, din), dtype, -bound, bound)
            b = jax.random.uniform(kb, (dout,), dtype, -bound, bound)
            return w.T, b.reshape(1, dout)

        wa, ba = init_linear(ks[0], ks[1], hidden, d_a)       # encoder "a"
        wb, bb = init_linear(ks[2], ks[3], hidden, d_b)       # encoder "b"
        wc, bc = init_linear(ks[4], ks[5], feat, 2 * hidden)  # combiner ([2H, F])
        wd1, bd1 = init_linear(ks[6], ks[7], o1, feat)        # decoder "out1"
        wd2, bd2 = init_linear(ks[8], ks[9], o2, feat)        # decoder "out2"

        self.params = dict(
            wa=wa, ba=ba,
            wb=wb, bb=bb,
            # row-split of the combiner weight replaces the explicit concat
            wca=wc[:hidden], wcb=wc[hidden:], bc=bc,
            wd1=wd1, bd1=bd1,
            wd2=wd2, bd2=bd2,
        )

    def __call__(self, x):
        # encoder iteration order matches the dict order of the encoders: "a", "b"
        return ecd_forward(x["a"], x["b"], self.params)


def _reference_forward(model, x):
    """Pure-jnp reference (explicit concat, full combiner weight)."""
    p = model.params

    def lin(xx, w_t, b, relu):
        y = xx @ w_t + b
        return jnp.maximum(y, 0.0) if relu else y

    ea = lin(x["a"], p["wa"], p["ba"], True)
    eb = lin(x["b"], p["wb"], p["bb"], True)
    wc_full = jnp.concatenate([p["wca"], p["wcb"]], axis=0)
    feats = lin(jnp.concatenate([ea, eb], axis=1), wc_full, p["bc"], True)
    return {
        "out1": lin(feats, p["wd1"], p["bd1"], False),
        "out2": lin(feats, p["wd2"], p["bd2"], False),
    }


if __name__ == "__main__":
    key = jax.random.PRNGKey(0)
    k_param, k_a, k_b = jax.random.split(key, 3)

    B, D_A, D_B = 8, 16, 32
    model = ECDPallas(k_param, d_a=D_A, d_b=D_B, hidden=32, feat=64, o1=16, o2=8)

    x = {
        "a": jax.random.normal(k_a, (B, D_A), jnp.float32),
        "b": jax.random.normal(k_b, (B, D_B), jnp.float32),
    }

    out = model(x)
    out = jax.tree_util.tree_map(jax.block_until_ready, out)

    ref = _reference_forward(model, x)
    for name in ("out1", "out2"):
        assert out[name].shape == ref[name].shape, name
        assert jnp.allclose(out[name], ref[name], atol=1e-5, rtol=1e-5), name

    print("KERNEL_OK")
</pallas_src>

<mosaic_0001>
module attributes {stable_mosaic.version = 11 : i64} {
  func.func @_ecd_fused_kernel(%arg0: i32, %arg1: memref<8x16xf32, #tpu.memory_space<vmem>>, %arg2: memref<8x32xf32, #tpu.memory_space<vmem>>, %arg3: memref<16x32xf32, #tpu.memory_space<vmem>>, %arg4: memref<1x32xf32, #tpu.memory_space<vmem>>, %arg5: memref<32x32xf32, #tpu.memory_space<vmem>>, %arg6: memref<1x32xf32, #tpu.memory_space<vmem>>, %arg7: memref<32x64xf32, #tpu.memory_space<vmem>>, %arg8: memref<32x64xf32, #tpu.memory_space<vmem>>, %arg9: memref<1x64xf32, #tpu.memory_space<vmem>>, %arg10: memref<64x16xf32, #tpu.memory_space<vmem>>, %arg11: memref<1x16xf32, #tpu.memory_space<vmem>>, %arg12: memref<64x8xf32, #tpu.memory_space<vmem>>, %arg13: memref<1x8xf32, #tpu.memory_space<vmem>>, %arg14: memref<8x16xf32, #tpu.memory_space<vmem>>, %arg15: memref<8x8xf32, #tpu.memory_space<vmem>>) attributes {dimension_semantics = [#tpu.dimension_semantics<parallel>], iteration_bounds = array<i64: 1>, scalar_prefetch = 0 : i64, scratch_operands = 0 : i64, tpu.core_type = #tpu.core_type<tc>, window_params = [{transform_indices = @transform_0, window_bounds = array<i64: 8, 16>}, {transform_indices = @transform_1, window_bounds = array<i64: 8, 32>}, {pipeline_mode = #tpu.pipeline_mode<synchronous>, transform_indices = @transform_2, window_bounds = array<i64: 16, 32>}, {pipeline_mode = #tpu.pipeline_mode<synchronous>, transform_indices = @transform_3, window_bounds = array<i64: 1, 32>}, {pipeline_mode = #tpu.pipeline_mode<synchronous>, transform_indices = @transform_4, window_bounds = array<i64: 32, 32>}, {pipeline_mode = #tpu.pipeline_mode<synchronous>, transform_indices = @transform_5, window_bounds = array<i64: 1, 32>}, {pipeline_mode = #tpu.pipeline_mode<synchronous>, transform_indices = @transform_6, window_bounds = array<i64: 32, 64>}, {pipeline_mode = #tpu.pipeline_mode<synchronous>, transform_indices = @transform_7, window_bounds = array<i64: 32, 64>}, {pipeline_mode = #tpu.pipeline_mode<synchronous>, transform_indices = @transform_8, window_bounds = array<i64: 1, 64>}, {pipeline_mode = #tpu.pipeline_mode<synchronous>, transform_indices = @transform_9, window_bounds = array<i64: 64, 16>}, {pipeline_mode = #tpu.pipeline_mode<synchronous>, transform_indices = @transform_10, window_bounds = array<i64: 1, 16>}, {pipeline_mode = #tpu.pipeline_mode<synchronous>, transform_indices = @transform_11, window_bounds = array<i64: 64, 8>}, {pipeline_mode = #tpu.pipeline_mode<synchronous>, transform_indices = @transform_12, window_bounds = array<i64: 1, 8>}, {transform_indices = @transform_13, window_bounds = array<i64: 8, 16>}, {transform_indices = @transform_14, window_bounds = array<i64: 8, 8>}]} {
    %c0 = arith.constant 0 : index
    %c0_0 = arith.constant 0 : index
    %0 = vector.load %arg1[%c0, %c0_0] : memref<8x16xf32, #tpu.memory_space<vmem>>, vector<8x16xf32>
    %c0_1 = arith.constant 0 : index
    %c0_2 = arith.constant 0 : index
    %1 = vector.load %arg3[%c0_1, %c0_2] : memref<16x32xf32, #tpu.memory_space<vmem>>, vector<16x32xf32>
    %cst = arith.constant dense<0.000000e+00> : vector<8x32xf32>
    %2 = tpu.matmul %0, %1, %cst {dimension_numbers = #tpu.dot_dimension_numbers<[1], [0], [0], [1], [0, 0, 1, 1], [], []>} : vector<8x16xf32>, vector<16x32xf32>, vector<8x32xf32> -> vector<8x32xf32>
    %c0_3 = arith.constant 0 : index
    %c0_4 = arith.constant 0 : index
    %3 = vector.load %arg4[%c0_3, %c0_4] : memref<1x32xf32, #tpu.memory_space<vmem>>, vector<1x32xf32>
    %4 = vector.broadcast %3 : vector<1x32xf32> to vector<8x32xf32>
    %5 = arith.addf %2, %4 : vector<8x32xf32>
    %cst_5 = arith.constant 0.000000e+00 : f32
    %6 = vector.broadcast %cst_5 : f32 to vector<8x32xf32>
    %7 = arith.maximumf %5, %6 : vector<8x32xf32>
    %c0_6 = arith.constant 0 : index
    %c0_7 = arith.constant 0 : index
    %8 = vector.load %arg2[%c0_6, %c0_7] : memref<8x32xf32, #tpu.memory_space<vmem>>, vector<8x32xf32>
    %c0_8 = arith.constant 0 : index
    %c0_9 = arith.constant 0 : index
    %9 = vector.load %arg5[%c0_8, %c0_9] : memref<32x32xf32, #tpu.memory_space<vmem>>, vector<32x32xf32>
    %cst_10 = arith.constant dense<0.000000e+00> : vector<8x32xf32>
    %10 = tpu.matmul %8, %9, %cst_10 {dimension_numbers = #tpu.dot_dimension_numbers<[1], [0], [0], [1], [0, 0, 1, 1], [], []>} : vector<8x32xf32>, vector<32x32xf32>, vector<8x32xf32> -> vector<8x32xf32>
    %c0_11 = arith.constant 0 : index
    %c0_12 = arith.constant 0 : index
    %11 = vector.load %arg6[%c0_11, %c0_12] : memref<1x32xf32, #tpu.memory_space<vmem>>, vector<1x32xf32>
    %12 = vector.broadcast %11 : vector<1x32xf32> to vector<8x32xf32>
    %13 = arith.addf %10, %12 : vector<8x32xf32>
    %cst_13 = arith.constant 0.000000e+00 : f32
    %14 = vector.broadcast %cst_13 : f32 to vector<8x32xf32>
    %15 = arith.maximumf %13, %14 : vector<8x32xf32>
    %c0_14 = arith.constant 0 : index
    %c0_15 = arith.constant 0 : index
    %16 = vector.load %arg7[%c0_14, %c0_15] : memref<32x64xf32, #tpu.memory_space<vmem>>, vector<32x64xf32>
    %cst_16 = arith.constant dense<0.000000e+00> : vector<8x64xf32>
    %17 = tpu.matmul %7, %16, %cst_16 {dimension_numbers = #tpu.dot_dimension_numbers<[1], [0], [0], [1], [0, 0, 1, 1], [], []>} : vector<8x32xf32>, vector<32x64xf32>, vector<8x64xf32> -> vector<8x64xf32>
    %c0_17 = arith.constant 0 : index
    %c0_18 = arith.constant 0 : index
    %18 = vector.load %arg8[%c0_17, %c0_18] : memref<32x64xf32, #tpu.memory_space<vmem>>, vector<32x64xf32>
    %cst_19 = arith.constant dense<0.000000e+00> : vector<8x64xf32>
    %19 = tpu.matmul %15, %18, %cst_19 {dimension_numbers = #tpu.dot_dimension_numbers<[1], [0], [0], [1], [0, 0, 1, 1], [], []>} : vector<8x32xf32>, vector<32x64xf32>, vector<8x64xf32> -> vector<8x64xf32>
    %20 = arith.addf %17, %19 : vector<8x64xf32>
    %c0_20 = arith.constant 0 : index
    %c0_21 = arith.constant 0 : index
    %21 = vector.load %arg9[%c0_20, %c0_21] : memref<1x64xf32, #tpu.memory_space<vmem>>, vector<1x64xf32>
    %22 = vector.broadcast %21 : vector<1x64xf32> to vector<8x64xf32>
    %23 = arith.addf %20, %22 : vector<8x64xf32>
    %cst_22 = arith.constant 0.000000e+00 : f32
    %24 = vector.broadcast %cst_22 : f32 to vector<8x64xf32>
    %25 = arith.maximumf %23, %24 : vector<8x64xf32>
    %c0_23 = arith.constant 0 : index
    %c0_24 = arith.constant 0 : index
    %26 = vector.load %arg10[%c0_23, %c0_24] : memref<64x16xf32, #tpu.memory_space<vmem>>, vector<64x16xf32>
    %cst_25 = arith.constant dense<0.000000e+00> : vector<8x16xf32>
    %27 = tpu.matmul %25, %26, %cst_25 {dimension_numbers = #tpu.dot_dimension_numbers<[1], [0], [0], [1], [0, 0, 1, 1], [], []>} : vector<8x64xf32>, vector<64x16xf32>, vector<8x16xf32> -> vector<8x16xf32>
    %c0_26 = arith.constant 0 : index
    %c0_27 = arith.constant 0 : index
    %28 = vector.load %arg11[%c0_26, %c0_27] : memref<1x16xf32, #tpu.memory_space<vmem>>, vector<1x16xf32>
    %29 = vector.broadcast %28 : vector<1x16xf32> to vector<8x16xf32>
    %30 = arith.addf %27, %29 : vector<8x16xf32>
    %c0_28 = arith.constant 0 : index
    %c0_29 = arith.constant 0 : index
    %31 = vector.load %arg14[%c0_28, %c0_29] : memref<8x16xf32, #tpu.memory_space<vmem>>, vector<8x16xf32>
    tpu.vector_store %arg14[%c0_28, %c0_29], %30 {strides = array<i32>} : memref<8x16xf32, #tpu.memory_space<vmem>>, vector<8x16xf32>,
    %c0_30 = arith.constant 0 : index
    %c0_31 = arith.constant 0 : index
    %32 = vector.load %arg12[%c0_30, %c0_31] : memref<64x8xf32, #tpu.memory_space<vmem>>, vector<64x8xf32>
    %cst_32 = arith.constant dense<0.000000e+00> : vector<8x8xf32>
    %33 = tpu.matmul %25, %32, %cst_32 {dimension_numbers = #tpu.dot_dimension_numbers<[1], [0], [0], [1], [0, 0, 1, 1], [], []>} : vector<8x64xf32>, vector<64x8xf32>, vector<8x8xf32> -> vector<8x8xf32>
    %c0_33 = arith.constant 0 : index
    %c0_34 = arith.constant 0 : index
    %34 = vector.load %arg13[%c0_33, %c0_34] : memref<1x8xf32, #tpu.memory_space<vmem>>, vector<1x8xf32>
    %35 = vector.broadcast %34 : vector<1x8xf32> to vector<8x8xf32>
    %36 = arith.addf %33, %35 : vector<8x8xf32>
    %c0_35 = arith.constant 0 : index
    %c0_36 = arith.constant 0 : index
    %37 = vector.load %arg15[%c0_35, %c0_36] : memref<8x8xf32, #tpu.memory_space<vmem>>, vector<8x8xf32>
    tpu.vector_store %arg15[%c0_35, %c0_36], %36 {strides = array<i32>} : memref<8x8xf32, #tpu.memory_space<vmem>>, vector<8x8xf32>,
    return
  }
  func.func @transform_0(%arg0: i32) -> (i32, i32) {
    %c0_i32 = arith.constant 0 : i32
    %c0_i32_0 = arith.constant 0 : i32
    return %arg0, %c0_i32 : i32, i32
  }
  func.func @transform_1(%arg0: i32) -> (i32, i32) {
    %c0_i32 = arith.constant 0 : i32
    %c0_i32_0 = arith.constant 0 : i32
    return %arg0, %c0_i32 : i32, i32
  }
  func.func @transform_2(%arg0: i32) -> (i32, i32) {
    %c0_i32 = arith.constant 0 : i32
    %c0_i32_0 = arith.constant 0 : i32
    %c0_i32_1 = arith.constant 0 : i32
    return %c0_i32, %c0_i32_0 : i32, i32
  }
  func.func @transform_3(%arg0: i32) -> (i32, i32) {
    %c0_i32 = arith.constant 0 : i32
    %c0_i32_0 = arith.constant 0 : i32
    %c0_i32_1 = arith.constant 0 : i32
    return %c0_i32, %c0_i32_0 : i32, i32
  }
  func.func @transform_4(%arg0: i32) -> (i32, i32) {
    %c0_i32 = arith.constant 0 : i32
    %c0_i32_0 = arith.constant 0 : i32
    %c0_i32_1 = arith.constant 0 : i32
    return %c0_i32, %c0_i32_0 : i32, i32
  }
  func.func @transform_5(%arg0: i32) -> (i32, i32) {
    %c0_i32 = arith.constant 0 : i32
    %c0_i32_0 = arith.constant 0 : i32
    %c0_i32_1 = arith.constant 0 : i32
    return %c0_i32, %c0_i32_0 : i32, i32
  }
  func.func @transform_6(%arg0: i32) -> (i32, i32) {
    %c0_i32 = arith.constant 0 : i32
    %c0_i32_0 = arith.constant 0 : i32
    %c0_i32_1 = arith.constant 0 : i32
    return %c0_i32, %c0_i32_0 : i32, i32
  }
  func.func @transform_7(%arg0: i32) -> (i32, i32) {
    %c0_i32 = arith.constant 0 : i32
    %c0_i32_0 = arith.constant 0 : i32
    %c0_i32_1 = arith.constant 0 : i32
    return %c0_i32, %c0_i32_0 : i32, i32
  }
  func.func @transform_8(%arg0: i32) -> (i32, i32) {
    %c0_i32 = arith.constant 0 : i32
    %c0_i32_0 = arith.constant 0 : i32
    %c0_i32_1 = arith.constant 0 : i32
    return %c0_i32, %c0_i32_0 : i32, i32
  }
  func.func @transform_9(%arg0: i32) -> (i32, i32) {
    %c0_i32 = arith.constant 0 : i32
    %c0_i32_0 = arith.constant 0 : i32
    %c0_i32_1 = arith.constant 0 : i32
    return %c0_i32, %c0_i32_0 : i32, i32
  }
  func.func @transform_10(%arg0: i32) -> (i32, i32) {
    %c0_i32 = arith.constant 0 : i32
    %c0_i32_0 = arith.constant 0 : i32
    %c0_i32_1 = arith.constant 0 : i32
    return %c0_i32, %c0_i32_0 : i32, i32
  }
  func.func @transform_11(%arg0: i32) -> (i32, i32) {
    %c0_i32 = arith.constant 0 : i32
    %c0_i32_0 = arith.constant 0 : i32
    %c0_i32_1 = arith.constant 0 : i32
    return %c0_i32, %c0_i32_0 : i32, i32
  }
  func.func @transform_12(%arg0: i32) -> (i32, i32) {
    %c0_i32 = arith.constant 0 : i32
    %c0_i32_0 = arith.constant 0 : i32
    %c0_i32_1 = arith.constant 0 : i32
    return %c0_i32, %c0_i32_0 : i32, i32
  }
  func.func @transform_13(%arg0: i32) -> (i32, i32) {
    %c0_i32 = arith.constant 0 : i32
    %c0_i32_0 = arith.constant 0 : i32
    return %arg0, %c0_i32 : i32, i32
  }
  func.func @transform_14(%arg0: i32) -> (i32, i32) {
    %c0_i32 = arith.constant 0 : i32
    %c0_i32_0 = arith.constant 0 : i32
    return %arg0, %c0_i32 : i32, i32
  }
}

</mosaic_0001>

<llo_original>
// kernel: tpu_custom_call.1
$region0: #{tpu_custom_call.1}
  #allocation0 [shape = 'u32[]', space=smem, size = 0x4, offset = 0x4, fixed_abs, tag = 'smem constant byte address 0x4 - core index']
  #allocation1 [shape = 'u32[144,128]{1,0:T(1,128)}', space=vmem, size = 0x12000, scoped, tag = 'internal scratch']
  %s0 = inlined_call_operand.vmem [shape: f32[8,16], index: 0, kind: input, shape index: {}]
  %s1 = inlined_call_operand.vmem [shape: f32[8,32], index: 1, kind: input, shape index: {}]
  %s2 = inlined_call_operand.vmem [shape: f32[16,32], index: 2, kind: input, shape index: {}]
  %s3 = inlined_call_operand.vmem [shape: f32[1,32], index: 3, kind: input, shape index: {}]
  %s4 = inlined_call_operand.vmem [shape: f32[32,32], index: 4, kind: input, shape index: {}]
  %s5 = inlined_call_operand.vmem [shape: f32[1,32], index: 5, kind: input, shape index: {}]
  %s6 = inlined_call_operand.vmem [shape: f32[32,64], index: 6, kind: input, shape index: {}]
  %s7 = inlined_call_operand.vmem [shape: f32[32,64], index: 7, kind: input, shape index: {}]
  %s8 = inlined_call_operand.vmem [shape: f32[1,64], index: 8, kind: input, shape index: {}]
  %s9 = inlined_call_operand.vmem [shape: f32[64,16], index: 9, kind: input, shape index: {}]
  %s10 = inlined_call_operand.vmem [shape: f32[1,16], index: 10, kind: input, shape index: {}]
  %s11 = inlined_call_operand.vmem [shape: f32[64,8], index: 11, kind: input, shape index: {}]
  %s12 = inlined_call_operand.vmem [shape: f32[1,8], index: 12, kind: input, shape index: {}]
  %s13 = inlined_call_operand.hbm [shape: f32[8,16], index: 13, kind: output, shape index: {0}]
  %s14 = inlined_call_operand.hbm [shape: f32[8,8], index: 14, kind: output, shape index: {1}]
  %15 = xla_tuple %s13, %s14
  %s16 = sld [smem:[#allocation0]]
  $region70: #{tpu_custom_call.1} parent=0
    _
  %s18 = ssub.s32 1, %s16
  %s19 = scalar_select 0, %s18, %s16
  $region1: #{tpu_custom_call.1} parent=0
    #allocation2 [shape = 'u8[4096]{0}', space=vmem, size = 0x1000, scoped, tag = 'output window, operand 0, single buffered']
    #allocation3 [shape = 's32[1]{0}', space=sflag, size = 0x4, scoped, tag = 'scoped memory for tpu_custom_call.1']
    #allocation4 [shape = 'u8[4096]{0}', space=vmem, size = 0x1000, scoped, tag = 'output window, operand 1, single buffered']
    #allocation5 [shape = 's32[1]{0}', space=sflag, size = 0x4, scoped, tag = 'scoped memory for tpu_custom_call.1']
    %20 = vsyncpa [#allocation3], 0
    %21 = vsyncpa [#allocation5], 0
    // Predicated region
    $region2: #{tpu_custom_call.1} parent=1 // pred_check
      _
    $region3: #{tpu_custom_call.1} parent=1 // pred_check_branch
      %23 = sbr.rel (0) target = $region5
    $region4: #{tpu_custom_call.1} parent=1 // pred_region
      _
    $region5: #{tpu_custom_call.1} parent=1 // pred_fallthru
      _
    // Predicated region
    $region6: #{tpu_custom_call.1} parent=1 // pred_check
      _
    $region7: #{tpu_custom_call.1} parent=1 // pred_check_branch
      %25 = sbr.rel (0) target = $region9
    $region8: #{tpu_custom_call.1} parent=1 // pred_region
      _
    $region9: #{tpu_custom_call.1} parent=1 // pred_fallthru
      _
    // Predicated region
    $region10: #{tpu_custom_call.1} parent=1 // pred_check
      _
    $region11: #{tpu_custom_call.1} parent=1 // pred_check_branch
      %27 = sbr.rel (0) target = $region13
    $region12: #{tpu_custom_call.1} parent=1 // pred_region
      _
    $region13: #{tpu_custom_call.1} parent=1 // pred_fallthru
      _
    // Predicated region
    $region14: #{tpu_custom_call.1} parent=1 // pred_check
      _
    $region15: #{tpu_custom_call.1} parent=1 // pred_check_branch
      %29 = sbr.rel (0) target = $region17
    $region16: #{tpu_custom_call.1} parent=1 // pred_region
      _
    $region17: #{tpu_custom_call.1} parent=1 // pred_fallthru
      _
    // Predicated region
    $region18: #{tpu_custom_call.1} parent=1 // pred_check
      _
    $region19: #{tpu_custom_call.1} parent=1 // pred_check_branch
      %31 = sbr.rel (0) target = $region21
    $region20: #{tpu_custom_call.1} parent=1 // pred_region
      _
    $region21: #{tpu_custom_call.1} parent=1 // pred_fallthru
      _
    // Predicated region
    $region22: #{tpu_custom_call.1} parent=1 // pred_check
      _
    $region23: #{tpu_custom_call.1} parent=1 // pred_check_branch
      %33 = sbr.rel (0) target = $region25
    $region24: #{tpu_custom_call.1} parent=1 // pred_region
      _
    $region25: #{tpu_custom_call.1} parent=1 // pred_fallthru
      _
    // Predicated region
    $region26: #{tpu_custom_call.1} parent=1 // pred_check
      _
    $region27: #{tpu_custom_call.1} parent=1 // pred_check_branch
      %35 = sbr.rel (0) target = $region29
    $region28: #{tpu_custom_call.1} parent=1 // pred_region
      _
    $region29: #{tpu_custom_call.1} parent=1 // pred_fallthru
      _
    // Predicated region
    $region30: #{tpu_custom_call.1} parent=1 // pred_check
      _
    $region31: #{tpu_custom_call.1} parent=1 // pred_check_branch
      %37 = sbr.rel (0) target = $region33
    $region32: #{tpu_custom_call.1} parent=1 // pred_region
      _
    $region33: #{tpu_custom_call.1} parent=1 // pred_fallthru
      _
    // Predicated region
    $region34: #{tpu_custom_call.1} parent=1 // pred_check
      _
    $region35: #{tpu_custom_call.1} parent=1 // pred_check_branch
      %39 = sbr.rel (0) target = $region37
    $region36: #{tpu_custom_call.1} parent=1 // pred_region
      _
    $region37: #{tpu_custom_call.1} parent=1 // pred_fallthru
      _
    // Predicated region
    $region38: #{tpu_custom_call.1} parent=1 // pred_check
      _
    $region39: #{tpu_custom_call.1} parent=1 // pred_check_branch
      %41 = sbr.rel (0) target = $region41
    $region40: #{tpu_custom_call.1} parent=1 // pred_region
      _
    $region41: #{tpu_custom_call.1} parent=1 // pred_fallthru
      _
    // Predicated region
    $region42: #{tpu_custom_call.1} parent=1 // pred_check
      _
    $region43: #{tpu_custom_call.1} parent=1 // pred_check_branch
      %43 = sbr.rel (0) target = $region45
    $region44: #{tpu_custom_call.1} parent=1 // pred_region
      _
    $region45: #{tpu_custom_call.1} parent=1 // pred_fallthru
      _
    // Predicated region
    $region46: #{tpu_custom_call.1} parent=1 // pred_check
      _
    $region47: #{tpu_custom_call.1} parent=1 // pred_check_branch
      %45 = sbr.rel (0) target = $region49
    $region48: #{tpu_custom_call.1} parent=1 // pred_region
      _
    $region49: #{tpu_custom_call.1} parent=1 // pred_fallthru
      _
    // Predicated region
    $region50: #{tpu_custom_call.1} parent=1 // pred_check
      _
    $region51: #{tpu_custom_call.1} parent=1 // pred_check_branch
      %47 = sbr.rel (0) target = $region53
    $region52: #{tpu_custom_call.1} parent=1 // pred_region
      _
    $region53: #{tpu_custom_call.1} parent=1 // pred_fallthru
      _
    %v48 = vld [vmem:[%s0] sm:$0xff]
    %v49 = vld [vmem:[%s2] sm:$0xff]
    %v50 = vld [vmem:[%s2 + $0x8] sm:$0xff]
    %v51 = vld [vmem:[%s3] sm:$0x1]
    %v53 = vlaneseq
    %v54 = vshrl.u32 %v53, 7
    %v55 = vsub.s32 0, %v54
    %v56 = vrot.slane %v51, %v55
    %vm58 = vcmask 130048
    %v60 = vsel %vm58, %v48, 0
    %62 = vmatprep.subr.mxu0 0.0
    %63 = vmatpush1.msra.mxu0 0.0
    %64 = vmatprep.subr.mxu0 0.0
    %65 = vmatpush1.msra.mxu0 0.0
    %66 = vmatprep.subr.mxu0 0.0
    %67 = vmatpush1.msra.mxu0 0.0
    %68 = vmatprep.subr.mxu0 0.0
    %69 = vmatpush1.msra.mxu0 0.0
    %70 = vmatprep.subr.mxu0 0.0
    %71 = vmatpush1.msra.mxu0 0.0
    %72 = vmatprep.subr.mxu0 0.0
    %73 = vmatpush1.msra.mxu0 0.0
    %74 = vmatprep.subr.mxu0 0.0
    %75 = vmatpush1.msra.mxu0 0.0
    %76 = vmatprep.subr.mxu0 0.0
    %77 = vmatpush1.msra.mxu0 0.0
    %78 = vmatprep.subr.mxu0 0.0
    %79 = vmatpush1.msra.mxu0 0.0
    %80 = vmatprep.subr.mxu0 0.0
    %81 = vmatpush1.msra.mxu0 0.0
    %82 = vmatprep.subr.mxu0 0.0
    %83 = vmatpush1.msra.mxu0 0.0
    %84 = vmatprep.subr.mxu0 0.0
    %85 = vmatpush1.msra.mxu0 0.0
    %86 = vmatprep.subr.mxu0 0.0
    %87 = vmatpush1.msra.mxu0 0.0
    %88 = vmatprep.subr.mxu0 0.0
    %89 = vmatpush1.msra.mxu0 0.0
    %90 = vmatprep.subr.mxu0 0.0
    %91 = vmatpush1.msra.mxu0 %v50
    %92 = vmatprep.subr.mxu0 0.0
    %93 = vmatpush1.msra.mxu0 %v49
    %94 = vmatprep.subr.mxu0 0.0
    %95 = vmatpush2.msra.mxu0 0.0
    %96 = vmatprep.subr.mxu0 0.0
    %97 = vmatpush2.msra.mxu0 0.0
    %98 = vmatprep.subr.mxu0 0.0
    %99 = vmatpush2.msra.mxu0 0.0
    %100 = vmatprep.subr.mxu0 0.0
    %101 = vmatpush2.msra.mxu0 0.0
    %102 = vmatprep.subr.mxu0 0.0
    %103 = vmatpush2.msra.mxu0 0.0
    %104 = vmatprep.subr.mxu0 0.0
    %105 = vmatpush2.msra.mxu0 0.0
    %106 = vmatprep.subr.mxu0 0.0
    %107 = vmatpush2.msra.mxu0 0.0
    %108 = vmatprep.subr.mxu0 0.0
    %109 = vmatpush2.msra.mxu0 0.0
    %110 = vmatprep.subr.mxu0 0.0
    %111 = vmatpush2.msra.mxu0 0.0
    %112 = vmatprep.subr.mxu0 0.0
    %113 = vmatpush2.msra.mxu0 0.0
    %114 = vmatprep.subr.mxu0 0.0
    %115 = vmatpush2.msra.mxu0 0.0
    %116 = vmatprep.subr.mxu0 0.0
    %117 = vmatpush2.msra.mxu0 0.0
    %118 = vmatprep.subr.mxu0 0.0
    %119 = vmatpush2.msra.mxu0 0.0
    %120 = vmatprep.subr.mxu0 0.0
    %121 = vmatpush2.msra.mxu0 0.0
    %122 = vmatprep.subr.mxu0 0.0
    %123 = vmatpush2.msra.mxu0 0.0
    %124 = vmatprep.subr.mxu0 0.0
    %125 = vmatpush2.msra.mxu0 0.0
    %126 = vmatprep.mubr.f32.mxu0 0.0
    %127 = vmatmul.mubr.f32.gmra.mxu0 %v60
    %v128 = vpop.f32.mrf.mxu0
    %v129 = vadd.f32 %v56, %v128
    %v130 = vpop.f32.mrf.mxu0
    %131 = vdwg.mxu0
    %v132 = vmax.f32 %v129, 0.0
    %v133 = vld [vmem:[%s1] sm:$0xff]
    %v134 = vld [vmem:[%s4] sm:$0xff]
    %v135 = vld [vmem:[%s4 + $0x8] sm:$0xff]
    %v136 = vld [vmem:[%s4 + $0x10] sm:$0xff]
    %v137 = vld [vmem:[%s4 + $0x18] sm:$0xff]
    %v138 = vld [vmem:[%s5] sm:$0x1]
    %v140 = vlaneseq
    %v141 = vshrl.u32 %v140, 7
    %v142 = vsub.s32 0, %v141
    %v143 = vrot.slane %v138, %v142
    %vm145 = vcmask 261120
    %v147 = vsel %vm145, %v133, 0
    %149 = vmatprep.subr.mxu0 0.0
    %150 = vmatpush1.msra.mxu0 0.0
    %151 = vmatprep.subr.mxu0 0.0
    %152 = vmatpush1.msra.mxu0 0.0
    %153 = vmatprep.subr.mxu0 0.0
    %154 = vmatpush1.msra.mxu0 0.0
    %155 = vmatprep.subr.mxu0 0.0
    %156 = vmatpush1.msra.mxu0 0.0
    %157 = vmatprep.subr.mxu0 0.0
    %158 = vmatpush1.msra.mxu0 0.0
    %159 = vmatprep.subr.mxu0 0.0
    %160 = vmatpush1.msra.mxu0 0.0
    %161 = vmatprep.subr.mxu0 0.0
    %162 = vmatpush1.msra.mxu0 0.0
    %163 = vmatprep.subr.mxu0 0.0
    %164 = vmatpush1.msra.mxu0 0.0
    %165 = vmatprep.subr.mxu0 0.0
    %166 = vmatpush1.msra.mxu0 0.0
    %167 = vmatprep.subr.mxu0 0.0
    %168 = vmatpush1.msra.mxu0 0.0
    %169 = vmatprep.subr.mxu0 0.0
    %170 = vmatpush1.msra.mxu0 0.0
    %171 = vmatprep.subr.mxu0 0.0
    %172 = vmatpush1.msra.mxu0 0.0
    %173 = vmatprep.subr.mxu0 0.0
    %174 = vmatpush1.msra.mxu0 %v137
    %175 = vmatprep.subr.mxu0 0.0
    %176 = vmatpush1.msra.mxu0 %v136
    %177 = vmatprep.subr.mxu0 0.0
    %178 = vmatpush1.msra.mxu0 %v135
    %179 = vmatprep.subr.mxu0 0.0
    %180 = vmatpush1.msra.mxu0 %v134
    %181 = vmatprep.subr.mxu0 0.0
    %182 = vmatpush2.msra.mxu0 0.0
    %183 = vmatprep.subr.mxu0 0.0
    %184 = vmatpush2.msra.mxu0 0.0
    %185 = vmatprep.subr.mxu0 0.0
    %186 = vmatpush2.msra.mxu0 0.0
    %187 = vmatprep.subr.mxu0 0.0
    %188 = vmatpush2.msra.mxu0 0.0
    %189 = vmatprep.subr.mxu0 0.0
    %190 = vmatpush2.msra.mxu0 0.0
    %191 = vmatprep.subr.mxu0 0.0
    %192 = vmatpush2.msra.mxu0 0.0
    %193 = vmatprep.subr.mxu0 0.0
    %194 = vmatpush2.msra.mxu0 0.0
    %195 = vmatprep.subr.mxu0 0.0
    %196 = vmatpush2.msra.mxu0 0.0
    %197 = vmatprep.subr.mxu0 0.0
    %198 = vmatpush2.msra.mxu0 0.0
    %199 = vmatprep.subr.mxu0 0.0
    %200 = vmatpush2.msra.mxu0 0.0
    %201 = vmatprep.subr.mxu0 0.0
    %202 = vmatpush2.msra.mxu0 0.0
    %203 = vmatprep.subr.mxu0 0.0
    %204 = vmatpush2.msra.mxu0 0.0
    %205 = vmatprep.subr.mxu0 0.0
    %206 = vmatpush2.msra.mxu0 0.0
    %207 = vmatprep.subr.mxu0 0.0
    %208 = vmatpush2.msra.mxu0 0.0
    %209 = vmatprep.subr.mxu0 0.0
    %210 = vmatpush2.msra.mxu0 0.0
    %211 = vmatprep.subr.mxu0 0.0
    %212 = vmatpush2.msra.mxu0 0.0
    %213 = vmatprep.mubr.f32.mxu0 0.0
    %214 = vmatmul.mubr.f32.gmra.mxu0 %v147
    %v215 = vpop.f32.mrf.mxu0
    %v216 = vadd.f32 %v143, %v215
    %v217 = vpop.f32.mrf.mxu0
    %218 = vdwg.mxu0
    %v219 = vmax.f32 %v216, 0.0
    %v220 = vld [vmem:[%s6] sm:$0xff]
    %v221 = vld [vmem:[%s6 + $0x8] sm:$0xff]
    %v222 = vld [vmem:[%s6 + $0x10] sm:$0xff]
    %v223 = vld [vmem:[%s6 + $0x18] sm:$0xff]
    %v224 = vld [vmem:[%s7] sm:$0xff]
    %v225 = vld [vmem:[%s7 + $0x8] sm:$0xff]
    %v226 = vld [vmem:[%s7 + $0x10] sm:$0xff]
    %v227 = vld [vmem:[%s7 + $0x18] sm:$0xff]
    %v229 = vsel %vm145, %v219, 0
    %231 = vmatprep.subr.mxu0 0.0
    %232 = vmatpush1.msra.mxu0 0.0
    %233 = vmatprep.subr.mxu0 0.0
    %234 = vmatpush1.msra.mxu0 0.0
    %235 = vmatprep.subr.mxu0 0.0
    %236 = vmatpush1.msra.mxu0 0.0
    %237 = vmatprep.subr.mxu0 0.0
    %238 = vmatpush1.msra.mxu0 0.0
    %239 = vmatprep.subr.mxu0 0.0
    %240 = vmatpush1.msra.mxu0 0.0
    %241 = vmatprep.subr.mxu0 0.0
    %242 = vmatpush1.msra.mxu0 0.0
    %243 = vmatprep.subr.mxu0 0.0
    %244 = vmatpush1.msra.mxu0 0.0
    %245 = vmatprep.subr.mxu0 0.0
    %246 = vmatpush1.msra.mxu0 0.0
    %247 = vmatprep.subr.mxu0 0.0
    %248 = vmatpush1.msra.mxu0 0.0
    %249 = vmatprep.subr.mxu0 0.0
    %250 = vmatpush1.msra.mxu0 0.0
    %251 = vmatprep.subr.mxu0 0.0
    %252 = vmatpush1.msra.mxu0 0.0
    %253 = vmatprep.subr.mxu0 0.0
    %254 = vmatpush1.msra.mxu0 0.0
    %255 = vmatprep.subr.mxu0 0.0
    %256 = vmatpush1.msra.mxu0 %v227
    %257 = vmatprep.subr.mxu0 0.0
    %258 = vmatpush1.msra.mxu0 %v226
    %259 = vmatprep.subr.mxu0 0.0
    %260 = vmatpush1.msra.mxu0 %v225
    %261 = vmatprep.subr.mxu0 0.0
    %262 = vmatpush1.msra.mxu0 %v224
    %263 = vmatprep.subr.mxu0 0.0
    %264 = vmatpush2.msra.mxu0 0.0
    %265 = vmatprep.subr.mxu0 0.0
    %266 = vmatpush2.msra.mxu0 0.0
    %267 = vmatprep.subr.mxu0 0.0
    %268 = vmatpush2.msra.mxu0 0.0
    %269 = vmatprep.subr.mxu0 0.0
    %270 = vmatpush2.msra.mxu0 0.0
    %271 = vmatprep.subr.mxu0 0.0
    %272 = vmatpush2.msra.mxu0 0.0
    %273 = vmatprep.subr.mxu0 0.0
    %274 = vmatpush2.msra.mxu0 0.0
    %275 = vmatprep.subr.mxu0 0.0
    %276 = vmatpush2.msra.mxu0 0.0
    %277 = vmatprep.subr.mxu0 0.0
    %278 = vmatpush2.msra.mxu0 0.0
    %279 = vmatprep.subr.mxu0 0.0
    %280 = vmatpush2.msra.mxu0 0.0
    %281 = vmatprep.subr.mxu0 0.0
    %282 = vmatpush2.msra.mxu0 0.0
    %283 = vmatprep.subr.mxu0 0.0
    %284 = vmatpush2.msra.mxu0 0.0
    %285 = vmatprep.subr.mxu0 0.0
    %286 = vmatpush2.msra.mxu0 0.0
    %287 = vmatprep.subr.mxu0 0.0
    %288 = vmatpush2.msra.mxu0 0.0
    %289 = vmatprep.subr.mxu0 0.0
    %290 = vmatpush2.msra.mxu0 0.0
    %291 = vmatprep.subr.mxu0 0.0
    %292 = vmatpush2.msra.mxu0 0.0
    %293 = vmatprep.subr.mxu0 0.0
    %294 = vmatpush2.msra.mxu0 0.0
    %295 = vmatprep.mubr.f32.mxu0 0.0
    %296 = vmatmul.mubr.f32.gmra.mxu0 %v229
    %v297 = vpop.f32.mrf.mxu0
    %v298 = vadd.f32 0.0, %v297
    %v299 = vpop.f32.mrf.mxu0
    %300 = vdwg.mxu0
    %v302 = vsel %vm145, %v132, 0
    %304 = vmatprep.subr.mxu0 0.0
    %305 = vmatpush1.msra.mxu0 0.0
    %306 = vmatprep.subr.mxu0 0.0
    %307 = vmatpush1.msra.mxu0 0.0
    %308 = vmatprep.subr.mxu0 0.0
    %309 = vmatpush1.msra.mxu0 0.0
    %310 = vmatprep.subr.mxu0 0.0
    %311 = vmatpush1.msra.mxu0 0.0
    %312 = vmatprep.subr.mxu0 0.0
    %313 = vmatpush1.msra.mxu0 0.0
    %314 = vmatprep.subr.mxu0 0.0
    %315 = vmatpush1.msra.mxu0 0.0
    %316 = vmatprep.subr.mxu0 0.0
    %317 = vmatpush1.msra.mxu0 0.0
    %318 = vmatprep.subr.mxu0 0.0
    %319 = vmatpush1.msra.mxu0 0.0
    %320 = vmatprep.subr.mxu0 0.0
    %321 = vmatpush1.msra.mxu0 0.0
    %322 = vmatprep.subr.mxu0 0.0
    %323 = vmatpush1.msra.mxu0 0.0
    %324 = vmatprep.subr.mxu0 0.0
    %325 = vmatpush1.msra.mxu0 0.0
    %326 = vmatprep.subr.mxu0 0.0
    %327 = vmatpush1.msra.mxu0 0.0
    %328 = vmatprep.subr.mxu0 0.0
    %329 = vmatpush1.msra.mxu0 %v223
    %330 = vmatprep.subr.mxu0 0.0
    %331 = vmatpush1.msra.mxu0 %v222
    %332 = vmatprep.subr.mxu0 0.0
    %333 = vmatpush1.msra.mxu0 %v221
    %334 = vmatprep.subr.mxu0 0.0
    %335 = vmatpush1.msra.mxu0 %v220
    %336 = vmatprep.subr.mxu0 0.0
    %337 = vmatpush2.msra.mxu0 0.0
    %338 = vmatprep.subr.mxu0 0.0
    %339 = vmatpush2.msra.mxu0 0.0
    %340 = vmatprep.subr.mxu0 0.0
    %341 = vmatpush2.msra.mxu0 0.0
    %342 = vmatprep.subr.mxu0 0.0
    %343 = vmatpush2.msra.mxu0 0.0
    %344 = vmatprep.subr.mxu0 0.0
    %345 = vmatpush2.msra.mxu0 0.0
    %346 = vmatprep.subr.mxu0 0.0
    %347 = vmatpush2.msra.mxu0 0.0
    %348 = vmatprep.subr.mxu0 0.0
    %349 = vmatpush2.msra.mxu0 0.0
    %350 = vmatprep.subr.mxu0 0.0
    %351 = vmatpush2.msra.mxu0 0.0
    %352 = vmatprep.subr.mxu0 0.0
    %353 = vmatpush2.msra.mxu0 0.0
    %354 = vmatprep.subr.mxu0 0.0
    %355 = vmatpush2.msra.mxu0 0.0
    %356 = vmatprep.subr.mxu0 0.0
    %357 = vmatpush2.msra.mxu0 0.0
    %358 = vmatprep.subr.mxu0 0.0
    %359 = vmatpush2.msra.mxu0 0.0
    %360 = vmatprep.subr.mxu0 0.0
    %361 = vmatpush2.msra.mxu0 0.0
    %362 = vmatprep.subr.mxu0 0.0
    %363 = vmatpush2.msra.mxu0 0.0
    %364 = vmatprep.subr.mxu0 0.0
    %365 = vmatpush2.msra.mxu0 0.0
    %366 = vmatprep.subr.mxu0 0.0
    %367 = vmatpush2.msra.mxu0 0.0
    %368 = vmatprep.mubr.f32.mxu0 0.0
    %369 = vmatmul.mubr.f32.gmra.mxu0 %v302
    %v370 = vpop.f32.mrf.mxu0
    %v371 = vadd.f32 %v298, %v370
    %v372 = vpop.f32.mrf.mxu0
    %373 = vdwg.mxu0
    %v374 = vld [vmem:[%s8] sm:$0x1]
    %v376 = vlaneseq
    %v377 = vshrl.u32 %v376, 7
    %v378 = vsub.s32 0, %v377
    %v379 = vrot.slane %v374, %v378
    %v381 = vadd.f32 %v371, %v379
    %v382 = vmax.f32 %v381, 0.0
    %v383 = vld [vmem:[%s9] sm:$0xff]
    %v384 = vld [vmem:[%s9 + $0x8] sm:$0xff]
    %v385 = vld [vmem:[%s9 + $0x10] sm:$0xff]
    %v386 = vld [vmem:[%s9 + $0x18] sm:$0xff]
    %v387 = vld [vmem:[%s9 + $0x20] sm:$0xff]
    %v388 = vld [vmem:[%s9 + $0x28] sm:$0xff]
    %v389 = vld [vmem:[%s9 + $0x30] sm:$0xff]
    %v390 = vld [vmem:[%s9 + $0x38] sm:$0xff]
    %v391 = vld [vmem:[%s10] sm:$0x1]
    %v393 = vlaneseq
    %v394 = vshrl.u32 %v393, 7
    %v395 = vsub.s32 0, %v394
    %v396 = vrot.slane %v391, %v395
    %vm398 = vcmask 523264
    %v400 = vsel %vm398, %v382, 0
    %402 = vmatprep.subr.mxu0 0.0
    %403 = vmatpush1.msra.mxu0 0.0
    %404 = vmatprep.subr.mxu0 0.0
    %405 = vmatpush1.msra.mxu0 0.0
    %406 = vmatprep.subr.mxu0 0.0
    %407 = vmatpush1.msra.mxu0 0.0
    %408 = vmatprep.subr.mxu0 0.0
    %409 = vmatpush1.msra.mxu0 0.0
    %410 = vmatprep.subr.mxu0 0.0
    %411 = vmatpush1.msra.mxu0 0.0
    %412 = vmatprep.subr.mxu0 0.0
    %413 = vmatpush1.msra.mxu0 0.0
    %414 = vmatprep.subr.mxu0 0.0
    %415 = vmatpush1.msra.mxu0 0.0
    %416 = vmatprep.subr.mxu0 0.0
    %417 = vmatpush1.msra.mxu0 0.0
    %418 = vmatprep.subr.mxu0 0.0
    %419 = vmatpush1.msra.mxu0 %v390
    %420 = vmatprep.subr.mxu0 0.0
    %421 = vmatpush1.msra.mxu0 %v389
    %422 = vmatprep.subr.mxu0 0.0
    %423 = vmatpush1.msra.mxu0 %v388
    %424 = vmatprep.subr.mxu0 0.0
    %425 = vmatpush1.msra.mxu0 %v387
    %426 = vmatprep.subr.mxu0 0.0
    %427 = vmatpush1.msra.mxu0 %v386
    %428 = vmatprep.subr.mxu0 0.0
    %429 = vmatpush1.msra.mxu0 %v385
    %430 = vmatprep.subr.mxu0 0.0
    %431 = vmatpush1.msra.mxu0 %v384
    %432 = vmatprep.subr.mxu0 0.0
    %433 = vmatpush1.msra.mxu0 %v383
    %434 = vmatprep.subr.mxu0 0.0
    %435 = vmatpush2.msra.mxu0 0.0
    %436 = vmatprep.subr.mxu0 0.0
    %437 = vmatpush2.msra.mxu0 0.0
    %438 = vmatprep.subr.mxu0 0.0
    %439 = vmatpush2.msra.mxu0 0.0
    %440 = vmatprep.subr.mxu0 0.0
    %441 = vmatpush2.msra.mxu0 0.0
    %442 = vmatprep.subr.mxu0 0.0
    %443 = vmatpush2.msra.mxu0 0.0
    %444 = vmatprep.subr.mxu0 0.0
    %445 = vmatpush2.msra.mxu0 0.0
    %446 = vmatprep.subr.mxu0 0.0
    %447 = vmatpush2.msra.mxu0 0.0
    %448 = vmatprep.subr.mxu0 0.0
    %449 = vmatpush2.msra.mxu0 0.0
    %450 = vmatprep.subr.mxu0 0.0
    %451 = vmatpush2.msra.mxu0 0.0
    %452 = vmatprep.subr.mxu0 0.0
    %453 = vmatpush2.msra.mxu0 0.0
    %454 = vmatprep.subr.mxu0 0.0
    %455 = vmatpush2.msra.mxu0 0.0
    %456 = vmatprep.subr.mxu0 0.0
    %457 = vmatpush2.msra.mxu0 0.0
    %458 = vmatprep.subr.mxu0 0.0
    %459 = vmatpush2.msra.mxu0 0.0
    %460 = vmatprep.subr.mxu0 0.0
    %461 = vmatpush2.msra.mxu0 0.0
    %462 = vmatprep.subr.mxu0 0.0
    %463 = vmatpush2.msra.mxu0 0.0
    %464 = vmatprep.subr.mxu0 0.0
    %465 = vmatpush2.msra.mxu0 0.0
    %466 = vmatprep.mubr.f32.mxu0 0.0
    %467 = vmatmul.mubr.f32.gmra.mxu0 %v400
    %v468 = vpop.f32.mrf.mxu0
    %v469 = vadd.f32 %v396, %v468
    %v470 = vpop.f32.mrf.mxu0
    %471 = vdwg.mxu0
    %472 = vst.msk [vmem:[#allocation2] sm:$0xff] %vm58, %v469
    %v473 = vld [vmem:[%s11] sm:$0xff]
    %v474 = vld [vmem:[%s11 + $0x8] sm:$0xff]
    %v475 = vld [vmem:[%s11 + $0x10] sm:$0xff]
    %v476 = vld [vmem:[%s11 + $0x18] sm:$0xff]
    %v477 = vld [vmem:[%s11 + $0x20] sm:$0xff]
    %v478 = vld [vmem:[%s11 + $0x28] sm:$0xff]
    %v479 = vld [vmem:[%s11 + $0x30] sm:$0xff]
    %v480 = vld [vmem:[%s11 + $0x38] sm:$0xff]
    %v481 = vld [vmem:[%s12] sm:$0x1]
    %v483 = vlaneseq
    %v484 = vshrl.u32 %v483, 7
    %v485 = vsub.s32 0, %v484
    %v486 = vrot.slane %v481, %v485
    %488 = vmatprep.subr.mxu0 0.0
    %489 = vmatpush1.msra.mxu0 0.0
    %490 = vmatprep.subr.mxu0 0.0
    %491 = vmatpush1.msra.mxu0 0.0
    %492 = vmatprep.subr.mxu0 0.0
    %493 = vmatpush1.msra.mxu0 0.0
    %494 = vmatprep.subr.mxu0 0.0
    %495 = vmatpush1.msra.mxu0 0.0
    %496 = vmatprep.subr.mxu0 0.0
    %497 = vmatpush1.msra.mxu0 0.0
    %498 = vmatprep.subr.mxu0 0.0
    %499 = vmatpush1.msra.mxu0 0.0
    %500 = vmatprep.subr.mxu0 0.0
    %501 = vmatpush1.msra.mxu0 0.0
    %502 = vmatprep.subr.mxu0 0.0
    %503 = vmatpush1.msra.mxu0 0.0
    %504 = vmatprep.subr.mxu0 0.0
    %505 = vmatpush1.msra.mxu0 %v480
    %506 = vmatprep.subr.mxu0 0.0
    %507 = vmatpush1.msra.mxu0 %v479
    %508 = vmatprep.subr.mxu0 0.0
    %509 = vmatpush1.msra.mxu0 %v478
    %510 = vmatprep.subr.mxu0 0.0
    %511 = vmatpush1.msra.mxu0 %v477
    %512 = vmatprep.subr.mxu0 0.0
    %513 = vmatpush1.msra.mxu0 %v476
    %514 = vmatprep.subr.mxu0 0.0
    %515 = vmatpush1.msra.mxu0 %v475
    %516 = vmatprep.subr.mxu0 0.0
    %517 = vmatpush1.msra.mxu0 %v474
    %518 = vmatprep.subr.mxu0 0.0
    %519 = vmatpush1.msra.mxu0 %v473
    %520 = vmatprep.subr.mxu0 0.0
    %521 = vmatpush2.msra.mxu0 0.0
    %522 = vmatprep.subr.mxu0 0.0
    %523 = vmatpush2.msra.mxu0 0.0
    %524 = vmatprep.subr.mxu0 0.0
    %525 = vmatpush2.msra.mxu0 0.0
    %526 = vmatprep.subr.mxu0 0.0
    %527 = vmatpush2.msra.mxu0 0.0
    %528 = vmatprep.subr.mxu0 0.0
    %529 = vmatpush2.msra.mxu0 0.0
    %530 = vmatprep.subr.mxu0 0.0
    %531 = vmatpush2.msra.mxu0 0.0
    %532 = vmatprep.subr.mxu0 0.0
    %533 = vmatpush2.msra.mxu0 0.0
    %534 = vmatprep.subr.mxu0 0.0
    %535 = vmatpush2.msra.mxu0 0.0
    %536 = vmatprep.subr.mxu0 0.0
    %537 = vmatpush2.msra.mxu0 0.0
    %538 = vmatprep.subr.mxu0 0.0
    %539 = vmatpush2.msra.mxu0 0.0
    %540 = vmatprep.subr.mxu0 0.0
    %541 = vmatpush2.msra.mxu0 0.0
    %542 = vmatprep.subr.mxu0 0.0
    %543 = vmatpush2.msra.mxu0 0.0
    %544 = vmatprep.subr.mxu0 0.0
    %545 = vmatpush2.msra.mxu0 0.0
    %546 = vmatprep.subr.mxu0 0.0
    %547 = vmatpush2.msra.mxu0 0.0
    %548 = vmatprep.subr.mxu0 0.0
    %549 = vmatpush2.msra.mxu0 0.0
    %550 = vmatprep.subr.mxu0 0.0
    %551 = vmatpush2.msra.mxu0 0.0
    %552 = vmatprep.mubr.f32.mxu0 0.0
    %553 = vmatmul.mubr.f32.gmra.mxu0 %v400
    %v554 = vpop.f32.mrf.mxu0
    %v555 = vadd.f32 %v486, %v554
    %v556 = vpop.f32.mrf.mxu0
    %557 = vdwg.mxu0
    %vm558 = vcmask 64512
    %559 = vst.msk [vmem:[#allocation4] sm:$0xff] %vm558, %v555
    // Predicated region
    $region54: #{tpu_custom_call.1} parent=1 // pred_check
      _
    $region55: #{tpu_custom_call.1} parent=1 // pred_check_branch
      %561 = sbr.rel (0) target = $region57
    $region56: #{tpu_custom_call.1} parent=1 // pred_region
      %s563 = ssub.s32 128, 128
      %564 = vsyncadd [#allocation3], %s563
      %s566 = sshll.u32 [#allocation2], 4
      %s567 = int_to_ptr.vmem [resolvable:$true] %s566
      %569 = dma.vmem_to_hbm [thread:$0]  %s567, 128, %s13, [#allocation3]
    $region57: #{tpu_custom_call.1} parent=1 // pred_fallthru
      _
    // Predicated region
    $region58: #{tpu_custom_call.1} parent=1 // pred_check
      _
    $region59: #{tpu_custom_call.1} parent=1 // pred_check_branch
      %571 = sbr.rel (0) target = $region61
    $region60: #{tpu_custom_call.1} parent=1 // pred_region
      %s573 = ssub.s32 128, 128
      %574 = vsyncadd [#allocation5], %s573
      %s576 = sshll.u32 [#allocation4], 4
      %s577 = int_to_ptr.vmem [resolvable:$true] %s576
      %579 = dma.vmem_to_hbm [thread:$0]  %s577, 128, %s14, [#allocation5]
    $region61: #{tpu_custom_call.1} parent=1 // pred_fallthru
      _
    // Predicated region
    $region62: #{tpu_custom_call.1} parent=1 // pred_check
      _
    $region63: #{tpu_custom_call.1} parent=1 // pred_check_branch
      %581 = sbr.rel (0) target = $region65
    $region64: #{tpu_custom_call.1} parent=1 // pred_region
      %582 = dma.done [#allocation3], 128
    $region65: #{tpu_custom_call.1} parent=1 // pred_fallthru
      _
    // Predicated region
    $region66: #{tpu_custom_call.1} parent=1 // pred_check
      _
    $region67: #{tpu_custom_call.1} parent=1 // pred_check_branch
      %584 = sbr.rel (0) target = $region69
    $region68: #{tpu_custom_call.1} parent=1 // pred_region
      %585 = dma.done [#allocation5], 128
    $region69: #{tpu_custom_call.1} parent=1 // pred_fallthru
      _
    %586 = vsyncpa [#allocation3], 1
    %587 = vsyncpa [#allocation5], 1

</llo_original>
